<compile_context>
chip_gen: v5e
topology: v5e:2x2
jax: 0.10.0
libtpu: 0.0.40
codegen_flags: <defaults>
</compile_context>

<pallas_src>
import functools

import numpy as np
import jax
import jax.numpy as jnp
from jax.experimental import pallas as pl
from jax.experimental.pallas import tpu as pltpu


# ---------------------------------------------------------------------------
# exact-GELU epilogue helpers (Abramowitz & Stegun 7.1.26 erf, |err| < 1.5e-7)
# ---------------------------------------------------------------------------
_SQRT1_2 = 0.7071067811865476


def _erf_kernel(x):
    a1, a2, a3, a4, a5 = (0.254829592, -0.284496736, 1.421413741,
                          -1.453152027, 1.061405429)
    pc = 0.3275911
    ax = jnp.abs(x)
    # EUP approximate reciprocal instead of a VPU divide.
    t = pl.reciprocal(1.0 + pc * ax, approx=True)
    poly = ((((a5 * t + a4) * t + a3) * t + a2) * t + a1) * t
    y = 1.0 - poly * jnp.exp(-ax * ax)
    return jnp.where(x >= 0.0, y, -y)


def _gelu_kernel(x):
    return 0.5 * x * (1.0 + _erf_kernel(x * _SQRT1_2))


# ---------------------------------------------------------------------------
# Pallas kernel: (tm, K)bf16 x (K, E_pad)bf16 -> f32 acc, + bias, + GELU
# ---------------------------------------------------------------------------
def _patch_embed_kernel(cols_ref, w_ref, b_ref, out_ref):
    acc = jnp.dot(cols_ref[...], w_ref[...],
                  preferred_element_type=jnp.float32)   # single MXU pass
    acc = acc + b_ref[...]                              # (1, E_pad) broadcast
    out_ref[...] = _gelu_kernel(acc).astype(out_ref.dtype)


def _pick_row_tile(M, K, E_pad, budget_bytes=24 << 20):
    """Largest multiple-of-8 row tile whose working set fits the VMEM budget,
    capped so >=4 row tiles exist (keeps both v7x TCs busy + pipeline depth)."""
    weight_bytes = 2 * (K * E_pad * 2 + E_pad * 4)   # resident w(bf16)+bias(f32), 2 bufs
    row_bytes = 2 * (K * 2 + E_pad * 4)              # dbl-buffered cols(bf16)+out(f32) per row
    tm = (budget_bytes - weight_bytes) // row_bytes
    tm = max(8, min(512, (tm // 8) * 8))
    if M >= 32:
        tm = min(tm, max(8, ((M + 3) // 4 + 7) // 8 * 8))
    if M < 8:
        tm = M                                       # full-dim block: exempt from 8-rule
    return tm, weight_bytes, row_bytes


def _fused_matmul_bias_gelu(cols, w_mat, bias):
    """cols (M,K) bf16, w_mat (K,E) bf16, bias (1,E) f32 -> GELU(cols@w + b) f32."""
    M, K = cols.shape
    E = w_mat.shape[1]

    # Lane-dense output: pad E to a multiple of 128 (zero columns in the small
    # weight/bias arrays only), slice off afterwards.
    E_pad = pl.cdiv(E, 128) * 128
    if E_pad != E:
        w_mat = jnp.pad(w_mat, ((0, 0), (0, E_pad - E)))
        bias = jnp.pad(bias, ((0, 0), (0, E_pad - E)))

    tm, weight_bytes, row_bytes = _pick_row_tile(M, K, E_pad)
    grid_m = pl.cdiv(M, tm)
    vmem_limit = int(min(56 << 20,
                         max(32 << 20, weight_bytes + tm * row_bytes + (4 << 20))))

    out = pl.pallas_call(
        _patch_embed_kernel,
        out_shape=jax.ShapeDtypeStruct((M, E_pad), jnp.float32),
        grid=(grid_m,),
        in_specs=[
            pl.BlockSpec((tm, K), lambda i: (i, 0)),      # streamed row tiles
            pl.BlockSpec((K, E_pad), lambda i: (0, 0)),   # weight: resident, fetched once
            pl.BlockSpec((1, E_pad), lambda i: (0, 0)),   # bias: resident
        ],
        out_specs=pl.BlockSpec((tm, E_pad), lambda i: (i, 0)),
        compiler_params=pltpu.CompilerParams(
            dimension_semantics=("parallel",),
            vmem_limit_bytes=vmem_limit),
    )(cols, w_mat, bias)
    return out[:, :E] if E_pad != E else out


# ---------------------------------------------------------------------------
# im2col for 3-D overlapping patches (column order = PyTorch (C, kd, kh, kw))
# ---------------------------------------------------------------------------
def _im2col_3d(x, k, s, dtype=jnp.bfloat16):
    """x: (N, C, D, H, W) -> ((N*Od*Oh*Ow, C*k^3) in `dtype`, (Od, Oh, Ow))."""
    # TODO(synk): fuse this gather into the kernel via PrefetchScalarGridSpec
    # offset tables + make_async_copy to avoid materializing the blown-up cols.
    p = k // 2
    N, C, D, H, W = x.shape
    xp = jnp.pad(x, ((0, 0), (0, 0), (p, p), (p, p), (p, p))).astype(dtype)
    Od = (D + 2 * p - k) // s + 1
    Oh = (H + 2 * p - k) // s + 1
    Ow = (W + 2 * p - k) // s + 1
    xd = jnp.stack([xp[:, :, i:i + s * (Od - 1) + 1:s] for i in range(k)], axis=3)
    xh = jnp.stack([xd[:, :, :, :, i:i + s * (Oh - 1) + 1:s] for i in range(k)], axis=5)
    xw = jnp.stack([xh[..., i:i + s * (Ow - 1) + 1:s] for i in range(k)], axis=7)
    # (N, C, Od, kd, Oh, kh, Ow, kw) -> (N, Od, Oh, Ow, C, kd, kh, kw)
    patches = jnp.transpose(xw, (0, 2, 4, 6, 1, 3, 5, 7))
    return patches.reshape(N * Od * Oh * Ow, C * k * k * k), (Od, Oh, Ow)


# ---------------------------------------------------------------------------
# OverlapPatchEmbed forward (flatten=True path of the PyTorch module)
# ---------------------------------------------------------------------------
@functools.partial(jax.jit, static_argnames=("patch_size", "stride"))
def _overlap_patch_embed_impl(x, w, b, patch_size, stride):
    N = x.shape[0]
    E = w.shape[0]
    cols, (Od, Oh, Ow) = _im2col_3d(x, patch_size, stride)        # (M, K) bf16
    w_mat = w.reshape(E, -1).T.astype(jnp.bfloat16)               # (K, E) bf16
    bias = b.astype(jnp.float32).reshape(1, E)                    # (1, E) f32
    tokens = _fused_matmul_bias_gelu(cols, w_mat, bias)           # (M, E) f32
    return tokens.reshape(N, Od * Oh * Ow, E)


def overlap_patch_embed(x, w, b, *, patch_size=7, stride=4):
    """Returns (tokens (N, num_patches, embed_dim), H, W, D) like the module."""
    p = patch_size // 2
    dims = tuple((d + 2 * p - patch_size) // stride + 1 for d in x.shape[2:])
    tokens = _overlap_patch_embed_impl(x, w, b, patch_size, stride)
    return (tokens,) + dims


# ---------------------------------------------------------------------------
# pure-JAX reference (real conv with the same bf16-cast inputs + exact GELU)
# ---------------------------------------------------------------------------
def _ref_overlap_patch_embed(x, w, b, patch_size, stride):
    p = patch_size // 2
    y = jax.lax.conv_general_dilated(
        x.astype(jnp.bfloat16), w.astype(jnp.bfloat16),
        window_strides=(stride,) * 3, padding=[(p, p)] * 3,
        dimension_numbers=("NCDHW", "OIDHW", "NCDHW"),
        preferred_element_type=jnp.float32)
    y = y + b.astype(jnp.float32).reshape(1, -1, 1, 1, 1)
    N, E = y.shape[:2]
    o1, o2, o3 = y.shape[2:]
    y = y.reshape(N, E, o1 * o2 * o3).transpose(0, 2, 1)
    y = jax.nn.gelu(y, approximate=False)
    return y, (o1, o2, o3)


# ---------------------------------------------------------------------------
if __name__ == "__main__":
    key = jax.random.PRNGKey(0)
    kx, kw, kb = jax.random.split(key, 3)

    # Small OverlapPatchEmbed config: img=16^3, in_chans=3, patch=7, stride=4, embed=32
    N, C, S = 2, 3, 16
    patch, stride, embed = 7, 4, 32

    x = jax.random.normal(kx, (N, C, S, S, S), dtype=jnp.float32)
    w = 0.02 * jax.random.normal(kw, (embed, C, patch, patch, patch), dtype=jnp.float32)
    b = 0.02 * jax.random.normal(kb, (embed,), dtype=jnp.float32)

    tokens, Ho, Wo, Do = overlap_patch_embed(x, w, b, patch_size=patch, stride=stride)
    tokens = jax.block_until_ready(tokens)

    ref, (r1, r2, r3) = _ref_overlap_patch_embed(x, w, b, patch, stride)
    ref = jax.block_until_ready(ref)

    assert (Ho, Wo, Do) == (r1, r2, r3) == (S // stride,) * 3
    assert tokens.shape == (N, Ho * Wo * Do, embed)
    # bf16 MXU path + A&S erf + approx reciprocal -> bf16-level tolerance.
    np.testing.assert_allclose(np.asarray(tokens), np.asarray(ref),
                               rtol=5e-3, atol=5e-3)
    print("KERNEL_OK")
</pallas_src>

<mosaic_0001>
module attributes {stable_mosaic.version = 11 : i64} {
  func.func @_patch_embed_kernel(%arg0: i32, %arg1: memref<32x1029xbf16, #tpu.memory_space<vmem>>, %arg2: memref<1029x128xbf16, #tpu.memory_space<vmem>>, %arg3: memref<1x128xf32, #tpu.memory_space<vmem>>, %arg4: memref<32x128xf32, #tpu.memory_space<vmem>>) attributes {dimension_semantics = [#tpu.dimension_semantics<parallel>], iteration_bounds = array<i64: 4>, scalar_prefetch = 0 : i64, scratch_operands = 0 : i64, tpu.core_type = #tpu.core_type<tc>, window_params = [{transform_indices = @transform_0, window_bounds = array<i64: 32, 1029>}, {pipeline_mode = #tpu.pipeline_mode<synchronous>, transform_indices = @transform_1, window_bounds = array<i64: 1029, 128>}, {pipeline_mode = #tpu.pipeline_mode<synchronous>, transform_indices = @transform_2, window_bounds = array<i64: 1, 128>}, {transform_indices = @transform_3, window_bounds = array<i64: 32, 128>}]} {
    %c0 = arith.constant 0 : index
    %c0_0 = arith.constant 0 : index
    %0 = vector.load %arg1[%c0, %c0_0] : memref<32x1029xbf16, #tpu.memory_space<vmem>>, vector<32x1029xbf16>
    %c0_1 = arith.constant 0 : index
    %c0_2 = arith.constant 0 : index
    %1 = vector.load %arg2[%c0_1, %c0_2] : memref<1029x128xbf16, #tpu.memory_space<vmem>>, vector<1029x128xbf16>
    %cst = arith.constant dense<0.000000e+00> : vector<32x128xf32>
    %2 = tpu.matmul %0, %1, %cst {dimension_numbers = #tpu.dot_dimension_numbers<[1], [0], [0], [1], [0, 0, 1, 1], [], []>} : vector<32x1029xbf16>, vector<1029x128xbf16>, vector<32x128xf32> -> vector<32x128xf32>
    %c0_3 = arith.constant 0 : index
    %c0_4 = arith.constant 0 : index
    %3 = vector.load %arg3[%c0_3, %c0_4] : memref<1x128xf32, #tpu.memory_space<vmem>>, vector<1x128xf32>
    %4 = vector.broadcast %3 : vector<1x128xf32> to vector<32x128xf32>
    %5 = arith.addf %2, %4 : vector<32x128xf32>
    %cst_5 = arith.constant 5.000000e-01 : f32
    %6 = vector.broadcast %cst_5 : f32 to vector<32x128xf32>
    %7 = arith.mulf %6, %5 : vector<32x128xf32>
    %cst_6 = arith.constant 0.707106769 : f32
    %8 = vector.broadcast %cst_6 : f32 to vector<32x128xf32>
    %9 = arith.mulf %5, %8 : vector<32x128xf32>
    %10 = math.absf %9 : vector<32x128xf32>
    %cst_7 = arith.constant 0.327591091 : f32
    %11 = vector.broadcast %cst_7 : f32 to vector<32x128xf32>
    %12 = arith.mulf %11, %10 : vector<32x128xf32>
    %cst_8 = arith.constant 1.000000e+00 : f32
    %13 = vector.broadcast %cst_8 : f32 to vector<32x128xf32>
    %14 = arith.addf %13, %12 : vector<32x128xf32>
    %15 = tpu.reciprocal %14 {approx = true} : vector<32x128xf32> -> vector<32x128xf32>
    %cst_9 = arith.constant 1.06140542 : f32
    %16 = vector.broadcast %cst_9 : f32 to vector<32x128xf32>
    %17 = arith.mulf %16, %15 : vector<32x128xf32>
    %cst_10 = arith.constant -1.45315206 : f32
    %18 = vector.broadcast %cst_10 : f32 to vector<32x128xf32>
    %19 = arith.addf %17, %18 : vector<32x128xf32>
    %20 = arith.mulf %19, %15 : vector<32x128xf32>
    %cst_11 = arith.constant 1.42141378 : f32
    %21 = vector.broadcast %cst_11 : f32 to vector<32x128xf32>
    %22 = arith.addf %20, %21 : vector<32x128xf32>
    %23 = arith.mulf %22, %15 : vector<32x128xf32>
    %cst_12 = arith.constant -0.284496725 : f32
    %24 = vector.broadcast %cst_12 : f32 to vector<32x128xf32>
    %25 = arith.addf %23, %24 : vector<32x128xf32>
    %26 = arith.mulf %25, %15 : vector<32x128xf32>
    %cst_13 = arith.constant 0.254829586 : f32
    %27 = vector.broadcast %cst_13 : f32 to vector<32x128xf32>
    %28 = arith.addf %26, %27 : vector<32x128xf32>
    %29 = arith.mulf %28, %15 : vector<32x128xf32>
    %cst_14 = arith.constant 0.000000e+00 : f32
    %30 = vector.broadcast %cst_14 : f32 to vector<32x128xf32>
    %31 = arith.subf %30, %10 : vector<32x128xf32>
    %32 = arith.mulf %31, %10 : vector<32x128xf32>
    %33 = math.exp %32 : vector<32x128xf32>
    %34 = arith.mulf %29, %33 : vector<32x128xf32>
    %cst_15 = arith.constant 1.000000e+00 : f32
    %35 = vector.broadcast %cst_15 : f32 to vector<32x128xf32>
    %36 = arith.subf %35, %34 : vector<32x128xf32>
    %cst_16 = arith.constant 0.000000e+00 : f32
    %37 = vector.broadcast %cst_16 : f32 to vector<32x128xf32>
    %38 = arith.cmpf oge, %9, %37 : vector<32x128xf32>
    %cst_17 = arith.constant 0.000000e+00 : f32
    %39 = vector.broadcast %cst_17 : f32 to vector<32x128xf32>
    %40 = arith.subf %39, %36 : vector<32x128xf32>
    %41 = arith.select %38, %36, %40 : vector<32x128xi1>, vector<32x128xf32>
    %cst_18 = arith.constant 1.000000e+00 : f32
    %42 = vector.broadcast %cst_18 : f32 to vector<32x128xf32>
    %43 = arith.addf %42, %41 : vector<32x128xf32>
    %44 = arith.mulf %7, %43 : vector<32x128xf32>
    %c0_19 = arith.constant 0 : index
    %c0_20 = arith.constant 0 : index
    %45 = vector.load %arg4[%c0_19, %c0_20] : memref<32x128xf32, #tpu.memory_space<vmem>>, vector<32x128xf32>
    tpu.vector_store %arg4[%c0_19, %c0_20], %44 {strides = array<i32>} : memref<32x128xf32, #tpu.memory_space<vmem>>, vector<32x128xf32>,
    return
  }
  func.func @transform_0(%arg0: i32) -> (i32, i32) {
    %c0_i32 = arith.constant 0 : i32
    %c0_i32_0 = arith.constant 0 : i32
    return %arg0, %c0_i32 : i32, i32
  }
  func.func @transform_1(%arg0: i32) -> (i32, i32) {
    %c0_i32 = arith.constant 0 : i32
    %c0_i32_0 = arith.constant 0 : i32
    %c0_i32_1 = arith.constant 0 : i32
    return %c0_i32, %c0_i32_0 : i32, i32
  }
  func.func @transform_2(%arg0: i32) -> (i32, i32) {
    %c0_i32 = arith.constant 0 : i32
    %c0_i32_0 = arith.constant 0 : i32
    %c0_i32_1 = arith.constant 0 : i32
    return %c0_i32, %c0_i32_0 : i32, i32
  }
  func.func @transform_3(%arg0: i32) -> (i32, i32) {
    %c0_i32 = arith.constant 0 : i32
    %c0_i32_0 = arith.constant 0 : i32
    return %arg0, %c0_i32 : i32, i32
  }
}

</mosaic_0001>

<llo_original>
// kernel: _overlap_patch_embed_impl.1
$region0: #{_overlap_patch_embed_impl.1}
  #allocation0 [shape = 'u32[]', space=smem, size = 0x4, offset = 0x4, fixed_abs, tag = 'smem constant byte address 0x4 - core index']
  #allocation1 [shape = 'u32[72,128]{1,0:T(1,128)}', space=vmem, size = 0x9000, scoped, tag = 'internal scratch']
  %s0 = inlined_call_operand.vmem [shape: bf16[128,1029], index: 0, kind: input, shape index: {}]
  %s1 = inlined_call_operand.vmem [shape: bf16[1029,128], index: 1, kind: input, shape index: {}]
  %s2 = inlined_call_operand.vmem [shape: f32[1,128], index: 2, kind: input, shape index: {}]
  %s3 = inlined_call_operand.vmem [shape: f32[128,128], index: 3, kind: output, shape index: {}]
  %s4 = sld [smem:[#allocation0]]
  $region45: #{_overlap_patch_embed_impl.1} parent=0
    _
  %s6 = ssub.s32 1, %s4
  %s7 = scalar_select 0, %s6, %s4
  loop: start=0, step=1, limit=6
  $region2: #{_overlap_patch_embed_impl.1} parent=0 // loop_pre_header
    _
  $region3: #{_overlap_patch_embed_impl.1} parent=0 // loop_header
    %s9 = sphi 0, %s13
    %p10 = scmp.ge.s32.totalorder %s9, 6
    %s19 = sphi 0, %s21
    %s22 = sphi 0, %s19
    %s23 = sphi 0, %s22
    %s39 = sphi 0, %s23
    %s43 = sphi 0, %s43
    %s45 = sphi 0, %s43
    %s46 = sphi 0, %s45
    %s60 = sphi 0, %s46
    %s64 = sphi 0, %s64
    %s66 = sphi 0, %s64
    %s67 = sphi 0, %s66
    %s81 = sphi 0, %s67
    %s87 = sphi 0, %s89
    %s90 = sphi 0, %s87
    %s91 = sphi 0, %s90
    %s107 = sphi 0, %s91
  $region4: #{_overlap_patch_embed_impl.1} parent=0 // loop_header_branch
    %12 = sbr.rel (%p10) target = $region8
  $region5: #{_overlap_patch_embed_impl.1} parent=0 // loop_body
    %s14 = ssub.s32 %s9, 1
    %s15 = ssub.s32 %s9, 2
    %s16 = sadd.s32 %s9, 1
    %s17 = ssub.s32 %s9, %s16
    %p18 = scmp.eq.s32.totalorder %s17, 0
    %s20 = sadd.s32 %s19, 1
    %s21 = scalar_select %p18, %s19, %s20
    %p24 = pneg %p18
    %p25 = scmp.eq.s32.totalorder %s9, 3
    %p26 = por %p24, %p25
    %p27 = scmp.ne.s32.totalorder %s19, %s22
    %p28 = scmp.eq.s32.totalorder %s9, 0
    %p29 = por %p27, %p28
    %p30 = scmp.ne.s32.totalorder %s19, %s22
    %p31 = scmp.eq.s32.totalorder %s14, 3
    %p32 = por %p30, %p31
    %p33 = scmp.ne.s32.totalorder %s22, %s23
    %p34 = scmp.eq.s32.totalorder %s14, 0
    %p35 = por %p33, %p34
    %p36 = scmp.ne.s32.totalorder %s22, %s23
    %p37 = scmp.eq.s32.totalorder %s15, 3
    %p38 = por %p36, %p37
    %p40 = scmp.ne.s32.totalorder %s23, %s39
    %p41 = scmp.eq.s32.totalorder %s15, 0
    %p42 = por %p40, %p41
    %s44 = sadd.s32 %s43, 1
    %p47 = scmp.eq.s32.totalorder %s9, 3
    %p48 = scmp.ne.s32.totalorder %s43, %s45
    %p49 = scmp.eq.s32.totalorder %s9, 0
    %p50 = por %p48, %p49
    %p51 = scmp.ne.s32.totalorder %s43, %s45
    %p52 = scmp.eq.s32.totalorder %s14, 3
    %p53 = por %p51, %p52
    %p54 = scmp.ne.s32.totalorder %s45, %s46
    %p55 = scmp.eq.s32.totalorder %s14, 0
    %p56 = por %p54, %p55
    %p57 = scmp.ne.s32.totalorder %s45, %s46
    %p58 = scmp.eq.s32.totalorder %s15, 3
    %p59 = por %p57, %p58
    %p61 = scmp.ne.s32.totalorder %s46, %s60
    %p62 = scmp.eq.s32.totalorder %s15, 0
    %p63 = por %p61, %p62
    %s65 = sadd.s32 %s64, 1
    %p68 = scmp.eq.s32.totalorder %s9, 3
    %p69 = scmp.ne.s32.totalorder %s64, %s66
    %p70 = scmp.eq.s32.totalorder %s9, 0
    %p71 = por %p69, %p70
    %p72 = scmp.ne.s32.totalorder %s64, %s66
    %p73 = scmp.eq.s32.totalorder %s14, 3
    %p74 = por %p72, %p73
    %p75 = scmp.ne.s32.totalorder %s66, %s67
    %p76 = scmp.eq.s32.totalorder %s14, 0
    %p77 = por %p75, %p76
    %p78 = scmp.ne.s32.totalorder %s66, %s67
    %p79 = scmp.eq.s32.totalorder %s15, 3
    %p80 = por %p78, %p79
    %p82 = scmp.ne.s32.totalorder %s67, %s81
    %p83 = scmp.eq.s32.totalorder %s15, 0
    %p84 = por %p82, %p83
    %s85 = ssub.s32 %s9, %s16
    %p86 = scmp.eq.s32.totalorder %s85, 0
    %s88 = sadd.s32 %s87, 1
    %s89 = scalar_select %p86, %s87, %s88
    %p92 = pneg %p86
    %p93 = scmp.eq.s32.totalorder %s9, 3
    %p94 = por %p92, %p93
    %p95 = scmp.ne.s32.totalorder %s87, %s90
    %p96 = scmp.eq.s32.totalorder %s9, 0
    %p97 = por %p95, %p96
    %p98 = scmp.ne.s32.totalorder %s87, %s90
    %p99 = scmp.eq.s32.totalorder %s14, 3
    %p100 = por %p98, %p99
    %p101 = scmp.ne.s32.totalorder %s90, %s91
    %p102 = scmp.eq.s32.totalorder %s14, 0
    %p103 = por %p101, %p102
    %p104 = scmp.ne.s32.totalorder %s90, %s91
    %p105 = scmp.eq.s32.totalorder %s15, 3
    %p106 = por %p104, %p105
    %p108 = scmp.ne.s32.totalorder %s91, %s107
    %p109 = scmp.eq.s32.totalorder %s15, 0
    %p110 = por %p108, %p109
    %p111 = scmp.le.s32.totalorder 1, %s9
    %p112 = scmp.lt.s32.totalorder %s9, 5
    %p113 = pnand %p111, %p112
    %p114 = pneg %p113
    // Predicated region
    $region9: #{_overlap_patch_embed_impl.1} parent=5 // pred_check
      _
    $region10: #{_overlap_patch_embed_impl.1} parent=5 // pred_check_branch
      %116 = sbr.rel (%p113) target = $region12
    $region11: #{_overlap_patch_embed_impl.1} parent=5 // pred_region
      %s117 = ssub.s32 %s9, 1
      // Predicated region
      $region13: #{_overlap_patch_embed_impl.1} parent=11 // pred_check
        %p118 = pneg %p56
      $region14: #{_overlap_patch_embed_impl.1} parent=11 // pred_check_branch
        %120 = sbr.rel (%p118) target = $region16
      $region15: #{_overlap_patch_embed_impl.1} parent=11 // pred_region
        _
      $region16: #{_overlap_patch_embed_impl.1} parent=11 // pred_fallthru
        _
      // Predicated region
      $region17: #{_overlap_patch_embed_impl.1} parent=11 // pred_check
        %p121 = pneg %p77
      $region18: #{_overlap_patch_embed_impl.1} parent=11 // pred_check_branch
        %123 = sbr.rel (%p121) target = $region20
      $region19: #{_overlap_patch_embed_impl.1} parent=11 // pred_region
        _
      $region20: #{_overlap_patch_embed_impl.1} parent=11 // pred_fallthru
        _
    $region12: #{_overlap_patch_embed_impl.1} parent=5 // pred_fallthru
      _
    %p124 = scmp.lt.s32.totalorder %s9, 4
    // Predicated region
    $region21: #{_overlap_patch_embed_impl.1} parent=5 // pred_check
      %p125 = pneg %p124
    $region22: #{_overlap_patch_embed_impl.1} parent=5 // pred_check_branch
      %127 = sbr.rel (%p125) target = $region24
    $region23: #{_overlap_patch_embed_impl.1} parent=5 // pred_region
      // Predicated region
      $region25: #{_overlap_patch_embed_impl.1} parent=23 // pred_check
        %p128 = pneg %p29
      $region26: #{_overlap_patch_embed_impl.1} parent=23 // pred_check_branch
        %130 = sbr.rel (%p128) target = $region28
      $region27: #{_overlap_patch_embed_impl.1} parent=23 // pred_region
        %s131 = smul.u32 4, %s9
        %p132 = scmp.lt.s32.totalorder %s131, 15
        %s133 = scalar_select %p132, %s131, 15
        %s134 = smul.addr %s133, 9
        %s135 = smul.addr %s134, 4
        %s136 = scalar_lea.vmem %s0, %s135
        %s137 = smul.u32 4, %s9
      $region28: #{_overlap_patch_embed_impl.1} parent=23 // pred_fallthru
        _
    $region24: #{_overlap_patch_embed_impl.1} parent=5 // pred_fallthru
      _
    %p138 = scmp.le.s32.totalorder 1, %s9
    %p139 = scmp.lt.s32.totalorder %s9, 5
    %p140 = pnand %p138, %p139
    %p141 = pneg %p140
    // Predicated region
    $region29: #{_overlap_patch_embed_impl.1} parent=5 // pred_check
      _
    $region30: #{_overlap_patch_embed_impl.1} parent=5 // pred_check_branch
      %143 = sbr.rel (%p140) target = $region32
    $region31: #{_overlap_patch_embed_impl.1} parent=5 // pred_region
      %s144 = ssub.s32 %s9, 1
      %s145 = smul.u32 4, %s14
      %p146 = scmp.lt.s32.totalorder %s145, 15
      %s147 = scalar_select %p146, %s145, 15
      %s148 = smul.addr %s147, 9
      %s149 = smul.addr %s148, 4
      %s150 = scalar_lea.vmem %s0, %s149
      %p151 = pneg %p35
      %p152 = pneg %p32
      %p153 = pneg %p56
      %p154 = pneg %p53
      %p155 = pneg %p77
      %p156 = pneg %p74
      %p157 = pneg %p103
      %p158 = pneg %p100
      %s159 = smul.u32 4, %s14
      %p160 = scmp.lt.s32.totalorder %s159, 15
      %s161 = scalar_select %p160, %s159, 15
      %s162 = smul.addr %s161, 8
      %s163 = scalar_lea.vmem %s3, %s162
      %s164 = smul.u32 4, %s14
      %p165 = scmp.lt.s32.totalorder %s164, 15
      %s166 = scalar_select %p165, %s164, 15
      %s167 = smul.addr %s166, 9
      %s168 = smul.addr %s167, 4
      %s169 = scalar_lea.vmem %s0, %s168
      %s170 = smul.u32 4, %s14
      %s171 = smul.u32 4, %s14
      %p172 = scmp.lt.s32.totalorder %s171, 15
      %s173 = scalar_select %p172, %s171, 15
      %s174 = smul.addr %s173, 8
      %s175 = scalar_lea.vmem %s3, %s174
      %s176 = smul.u32 4, %s14
      %v178 = vld [vmem:[%s169] sm:$0xff]
      %v179 = vld [vmem:[%s169 + $0x8] sm:$0xff]
      %v180 = vld [vmem:[%s169 + $0x10] sm:$0xff]
      %v181 = vld [vmem:[%s169 + $0x18] sm:$0xff]
      %v182 = vld [vmem:[%s169 + $0x20] sm:$0xf]
      %v183 = vld [vmem:[%s169 + $0x24] sm:$0xff]
      %v184 = vld [vmem:[%s169 + $0x2c] sm:$0xff]
      %v185 = vld [vmem:[%s169 + $0x34] sm:$0xff]
      %v186 = vld [vmem:[%s169 + $0x3c] sm:$0xff]
      %v187 = vld [vmem:[%s169 + $0x44] sm:$0xf]
      %v188 = vld [vmem:[%s169 + $0x48] sm:$0xff]
      %v189 = vld [vmem:[%s169 + $0x50] sm:$0xff]
      %v190 = vld [vmem:[%s169 + $0x58] sm:$0xff]
      %v191 = vld [vmem:[%s169 + $0x60] sm:$0xff]
      %v192 = vld [vmem:[%s169 + $0x68] sm:$0xf]
      %v193 = vld [vmem:[%s169 + $0x6c] sm:$0xff]
      %v194 = vld [vmem:[%s169 + $0x74] sm:$0xff]
      %v195 = vld [vmem:[%s169 + $0x7c] sm:$0xff]
      %v196 = vld [vmem:[%s169 + $0x84] sm:$0xff]
      %v197 = vld [vmem:[%s169 + $0x8c] sm:$0xf]
      %v198 = vld [vmem:[%s1] sm:$0xf]
      %v199 = vld [vmem:[%s1 + $0x4] sm:$0xf]
      %v200 = vld [vmem:[%s1 + $0x8] sm:$0xf]
      %v201 = vld [vmem:[%s1 + $0xc] sm:$0xf]
      %v202 = vld [vmem:[%s1 + $0x10] sm:$0xf]
      %v203 = vld [vmem:[%s1 + $0x14] sm:$0xf]
      %v204 = vld [vmem:[%s1 + $0x18] sm:$0xf]
      %v205 = vld [vmem:[%s1 + $0x1c] sm:$0xf]
      %v206 = vld [vmem:[%s1 + $0x20] sm:$0xf]
      %v207 = vld [vmem:[%s1 + $0x24] sm:$0xf]
      %v208 = vld [vmem:[%s1 + $0x28] sm:$0xf]
      %v209 = vld [vmem:[%s1 + $0x2c] sm:$0xf]
      %v210 = vld [vmem:[%s1 + $0x30] sm:$0xf]
      %v211 = vld [vmem:[%s1 + $0x34] sm:$0xf]
      %v212 = vld [vmem:[%s1 + $0x38] sm:$0xf]
      %v213 = vld [vmem:[%s1 + $0x3c] sm:$0xf]
      %v214 = vld [vmem:[%s1 + $0x40] sm:$0xf]
      %v215 = vld [vmem:[%s1 + $0x44] sm:$0xf]
      %v216 = vld [vmem:[%s1 + $0x48] sm:$0xf]
      %v217 = vld [vmem:[%s1 + $0x4c] sm:$0xf]
      %v218 = vld [vmem:[%s1 + $0x50] sm:$0xf]
      %v219 = vld [vmem:[%s1 + $0x54] sm:$0xf]
      %v220 = vld [vmem:[%s1 + $0x58] sm:$0xf]
      %v221 = vld [vmem:[%s1 + $0x5c] sm:$0xf]
      %v222 = vld [vmem:[%s1 + $0x60] sm:$0xf]
      %v223 = vld [vmem:[%s1 + $0x64] sm:$0xf]
      %v224 = vld [vmem:[%s1 + $0x68] sm:$0xf]
      %v225 = vld [vmem:[%s1 + $0x6c] sm:$0xf]
      %v226 = vld [vmem:[%s1 + $0x70] sm:$0xf]
      %v227 = vld [vmem:[%s1 + $0x74] sm:$0xf]
      %v228 = vld [vmem:[%s1 + $0x78] sm:$0xf]
      %v229 = vld [vmem:[%s1 + $0x7c] sm:$0xf]
      %v230 = vld [vmem:[%s1 + $0x80] sm:$0xf]
      %v231 = vld [vmem:[%s1 + $0x84] sm:$0xf]
      %v232 = vld [vmem:[%s1 + $0x88] sm:$0xf]
      %v233 = vld [vmem:[%s1 + $0x8c] sm:$0xf]
      %v234 = vld [vmem:[%s1 + $0x90] sm:$0xf]
      %v235 = vld [vmem:[%s1 + $0x94] sm:$0xf]
      %v236 = vld [vmem:[%s1 + $0x98] sm:$0xf]
      %v237 = vld [vmem:[%s1 + $0x9c] sm:$0xf]
      %v238 = vld [vmem:[%s1 + $0xa0] sm:$0xf]
      %v239 = vld [vmem:[%s1 + $0xa4] sm:$0xf]
      %v240 = vld [vmem:[%s1 + $0xa8] sm:$0xf]
      %v241 = vld [vmem:[%s1 + $0xac] sm:$0xf]
      %v242 = vld [vmem:[%s1 + $0xb0] sm:$0xf]
      %v243 = vld [vmem:[%s1 + $0xb4] sm:$0xf]
      %v244 = vld [vmem:[%s1 + $0xb8] sm:$0xf]
      %v245 = vld [vmem:[%s1 + $0xbc] sm:$0xf]
      %v246 = vld [vmem:[%s1 + $0xc0] sm:$0xf]
      %v247 = vld [vmem:[%s1 + $0xc4] sm:$0xf]
      %v248 = vld [vmem:[%s1 + $0xc8] sm:$0xf]
      %v249 = vld [vmem:[%s1 + $0xcc] sm:$0xf]
      %v250 = vld [vmem:[%s1 + $0xd0] sm:$0xf]
      %v251 = vld [vmem:[%s1 + $0xd4] sm:$0xf]
      %v252 = vld [vmem:[%s1 + $0xd8] sm:$0xf]
      %v253 = vld [vmem:[%s1 + $0xdc] sm:$0xf]
      %v254 = vld [vmem:[%s1 + $0xe0] sm:$0xf]
      %v255 = vld [vmem:[%s1 + $0xe4] sm:$0xf]
      %v256 = vld [vmem:[%s1 + $0xe8] sm:$0xf]
      %v257 = vld [vmem:[%s1 + $0xec] sm:$0xf]
      %v258 = vld [vmem:[%s1 + $0xf0] sm:$0xf]
      %v259 = vld [vmem:[%s1 + $0xf4] sm:$0xf]
      %v260 = vld [vmem:[%s1 + $0xf8] sm:$0xf]
      %v261 = vld [vmem:[%s1 + $0xfc] sm:$0xf]
      %v262 = vld [vmem:[%s1 + $0x100] sm:$0xf]
      %v263 = vld [vmem:[%s1 + $0x104] sm:$0xf]
      %v264 = vld [vmem:[%s1 + $0x108] sm:$0xf]
      %v265 = vld [vmem:[%s1 + $0x10c] sm:$0xf]
      %v266 = vld [vmem:[%s1 + $0x110] sm:$0xf]
      %v267 = vld [vmem:[%s1 + $0x114] sm:$0xf]
      %v268 = vld [vmem:[%s1 + $0x118] sm:$0xf]
      %v269 = vld [vmem:[%s1 + $0x11c] sm:$0xf]
      %v270 = vld [vmem:[%s1 + $0x120] sm:$0xf]
      %v271 = vld [vmem:[%s1 + $0x124] sm:$0xf]
      %v272 = vld [vmem:[%s1 + $0x128] sm:$0xf]
      %v273 = vld [vmem:[%s1 + $0x12c] sm:$0xf]
      %v274 = vld [vmem:[%s1 + $0x130] sm:$0xf]
      %v275 = vld [vmem:[%s1 + $0x134] sm:$0xf]
      %v276 = vld [vmem:[%s1 + $0x138] sm:$0xf]
      %v277 = vld [vmem:[%s1 + $0x13c] sm:$0xf]
      %v278 = vld [vmem:[%s1 + $0x140] sm:$0xf]
      %v279 = vld [vmem:[%s1 + $0x144] sm:$0xf]
      %v280 = vld [vmem:[%s1 + $0x148] sm:$0xf]
      %v281 = vld [vmem:[%s1 + $0x14c] sm:$0xf]
      %v282 = vld [vmem:[%s1 + $0x150] sm:$0xf]
      %v283 = vld [vmem:[%s1 + $0x154] sm:$0xf]
      %v284 = vld [vmem:[%s1 + $0x158] sm:$0xf]
      %v285 = vld [vmem:[%s1 + $0x15c] sm:$0xf]
      %v286 = vld [vmem:[%s1 + $0x160] sm:$0xf]
      %v287 = vld [vmem:[%s1 + $0x164] sm:$0xf]
      %v288 = vld [vmem:[%s1 + $0x168] sm:$0xf]
      %v289 = vld [vmem:[%s1 + $0x16c] sm:$0xf]
      %v290 = vld [vmem:[%s1 + $0x170] sm:$0xf]
      %v291 = vld [vmem:[%s1 + $0x174] sm:$0xf]
      %v292 = vld [vmem:[%s1 + $0x178] sm:$0xf]
      %v293 = vld [vmem:[%s1 + $0x17c] sm:$0xf]
      %v294 = vld [vmem:[%s1 + $0x180] sm:$0xf]
      %v295 = vld [vmem:[%s1 + $0x184] sm:$0xf]
      %v296 = vld [vmem:[%s1 + $0x188] sm:$0xf]
      %v297 = vld [vmem:[%s1 + $0x18c] sm:$0xf]
      %v298 = vld [vmem:[%s1 + $0x190] sm:$0xf]
      %v299 = vld [vmem:[%s1 + $0x194] sm:$0xf]
      %v300 = vld [vmem:[%s1 + $0x198] sm:$0xf]
      %v301 = vld [vmem:[%s1 + $0x19c] sm:$0xf]
      %v302 = vld [vmem:[%s1 + $0x1a0] sm:$0xf]
      %v303 = vld [vmem:[%s1 + $0x1a4] sm:$0xf]
      %v304 = vld [vmem:[%s1 + $0x1a8] sm:$0xf]
      %v305 = vld [vmem:[%s1 + $0x1ac] sm:$0xf]
      %v306 = vld [vmem:[%s1 + $0x1b0] sm:$0xf]
      %v307 = vld [vmem:[%s1 + $0x1b4] sm:$0xf]
      %v308 = vld [vmem:[%s1 + $0x1b8] sm:$0xf]
      %v309 = vld [vmem:[%s1 + $0x1bc] sm:$0xf]
      %v310 = vld [vmem:[%s1 + $0x1c0] sm:$0xf]
      %v311 = vld [vmem:[%s1 + $0x1c4] sm:$0xf]
      %v312 = vld [vmem:[%s1 + $0x1c8] sm:$0xf]
      %v313 = vld [vmem:[%s1 + $0x1cc] sm:$0xf]
      %v314 = vld [vmem:[%s1 + $0x1d0] sm:$0xf]
      %v315 = vld [vmem:[%s1 + $0x1d4] sm:$0xf]
      %v316 = vld [vmem:[%s1 + $0x1d8] sm:$0xf]
      %v317 = vld [vmem:[%s1 + $0x1dc] sm:$0xf]
      %v318 = vld [vmem:[%s1 + $0x1e0] sm:$0xf]
      %v319 = vld [vmem:[%s1 + $0x1e4] sm:$0xf]
      %v320 = vld [vmem:[%s1 + $0x1e8] sm:$0xf]
      %v321 = vld [vmem:[%s1 + $0x1ec] sm:$0xf]
      %v322 = vld [vmem:[%s1 + $0x1f0] sm:$0xf]
      %v323 = vld [vmem:[%s1 + $0x1f4] sm:$0xf]
      %v324 = vld [vmem:[%s1 + $0x1f8] sm:$0xf]
      %v325 = vld [vmem:[%s1 + $0x1fc] sm:$0xf]
      %v326 = vld [vmem:[%s1 + $0x200] sm:$0x7]
      %v327 = vld [vmem:[%s2] sm:$0x1]
      %v329 = vperm.slane %v327, 0
      %v351 = vunpack.c.l.b16 %v178
      %v352 = vunpack.c.h.b16 %v178
      %v353 = vunpack.c.l.b16 %v179
      %v354 = vunpack.c.h.b16 %v179
      %v355 = vunpack.c.l.b16 %v180
      %v356 = vunpack.c.h.b16 %v180
      %v357 = vunpack.c.l.b16 %v181
      %v358 = vunpack.c.h.b16 %v181
      %v359 = vunpack.c.l.b16 %v182
      %v360 = vunpack.c.l.b16 %v183
      %v361 = vunpack.c.h.b16 %v183
      %v362 = vunpack.c.l.b16 %v184
      %v363 = vunpack.c.h.b16 %v184
      %v364 = vunpack.c.l.b16 %v185
      %v365 = vunpack.c.h.b16 %v185
      %v366 = vunpack.c.l.b16 %v186
      %v367 = vunpack.c.h.b16 %v186
      %v368 = vunpack.c.l.b16 %v187
      %v369 = vunpack.c.l.b16 %v188
      %v370 = vunpack.c.h.b16 %v188
      %v371 = vunpack.c.l.b16 %v189
      %v372 = vunpack.c.h.b16 %v189
      %v373 = vunpack.c.l.b16 %v190
      %v374 = vunpack.c.h.b16 %v190
      %v375 = vunpack.c.l.b16 %v191
      %v376 = vunpack.c.h.b16 %v191
      %v377 = vunpack.c.l.b16 %v192
      %v378 = vunpack.c.l.b16 %v193
      %v379 = vunpack.c.h.b16 %v193
      %v380 = vunpack.c.l.b16 %v194
      %v381 = vunpack.c.h.b16 %v194
      %v382 = vunpack.c.l.b16 %v195
      %v383 = vunpack.c.h.b16 %v195
      %v384 = vunpack.c.l.b16 %v196
      %v385 = vunpack.c.h.b16 %v196
      %v386 = vunpack.c.l.b16 %v197
      %v387 = vpack.c.b16 %v360, %v351
      %v388 = vpack.c.b16 %v361, %v352
      %v389 = vpack.c.b16 %v362, %v353
      %v390 = vpack.c.b16 %v363, %v354
      %v391 = vpack.c.b16 %v364, %v355
      %v392 = vpack.c.b16 %v365, %v356
      %v393 = vpack.c.b16 %v366, %v357
      %v394 = vpack.c.b16 %v367, %v358
      %v395 = vpack.c.b16 %v368, %v359
      %v396 = vpack.c.b16 %v378, %v369
      %v397 = vpack.c.b16 %v379, %v370
      %v398 = vpack.c.b16 %v380, %v371
      %v399 = vpack.c.b16 %v381, %v372
      %v400 = vpack.c.b16 %v382, %v373
      %v401 = vpack.c.b16 %v383, %v374
      %v402 = vpack.c.b16 %v384, %v375
      %v403 = vpack.c.b16 %v385, %v376
      %v404 = vpack.c.b16 %v386, %v377
      %v550 = vunpack.c.l.b16 %v198
      %v551 = vunpack.c.l.b16 %v199
      %v552 = vunpack.c.l.b16 %v200
      %v553 = vunpack.c.l.b16 %v201
      %v554 = vunpack.c.l.b16 %v202
      %v555 = vunpack.c.l.b16 %v203
      %v556 = vunpack.c.l.b16 %v204
      %v557 = vunpack.c.l.b16 %v205
      %v558 = vunpack.c.l.b16 %v206
      %v559 = vunpack.c.l.b16 %v207
      %v560 = vunpack.c.l.b16 %v208
      %v561 = vunpack.c.l.b16 %v209
      %v562 = vunpack.c.l.b16 %v210
      %v563 = vunpack.c.l.b16 %v211
      %v564 = vunpack.c.l.b16 %v212
      %v565 = vunpack.c.l.b16 %v213
      %v566 = vunpack.c.l.b16 %v214
      %v567 = vunpack.c.l.b16 %v215
      %v568 = vunpack.c.l.b16 %v216
      %v569 = vunpack.c.l.b16 %v217
      %v570 = vunpack.c.l.b16 %v218
      %v571 = vunpack.c.l.b16 %v219
      %v572 = vunpack.c.l.b16 %v220
      %v573 = vunpack.c.l.b16 %v221
      %v574 = vunpack.c.l.b16 %v222
      %v575 = vunpack.c.l.b16 %v223
      %v576 = vunpack.c.l.b16 %v224
      %v577 = vunpack.c.l.b16 %v225
      %v578 = vunpack.c.l.b16 %v226
      %v579 = vunpack.c.l.b16 %v227
      %v580 = vunpack.c.l.b16 %v228
      %v581 = vunpack.c.l.b16 %v229
      %v582 = vunpack.c.l.b16 %v230
      %v583 = vunpack.c.l.b16 %v231
      %v584 = vunpack.c.l.b16 %v232
      %v585 = vunpack.c.l.b16 %v233
      %v586 = vunpack.c.l.b16 %v234
      %v587 = vunpack.c.l.b16 %v235
      %v588 = vunpack.c.l.b16 %v236
      %v589 = vunpack.c.l.b16 %v237
      %v590 = vunpack.c.l.b16 %v238
      %v591 = vunpack.c.l.b16 %v239
      %v592 = vunpack.c.l.b16 %v240
      %v593 = vunpack.c.l.b16 %v241
      %v594 = vunpack.c.l.b16 %v242
      %v595 = vunpack.c.l.b16 %v243
      %v596 = vunpack.c.l.b16 %v244
      %v597 = vunpack.c.l.b16 %v245
      %v598 = vunpack.c.l.b16 %v246
      %v599 = vunpack.c.l.b16 %v247
      %v600 = vunpack.c.l.b16 %v248
      %v601 = vunpack.c.l.b16 %v249
      %v602 = vunpack.c.l.b16 %v250
      %v603 = vunpack.c.l.b16 %v251
      %v604 = vunpack.c.l.b16 %v252
      %v605 = vunpack.c.l.b16 %v253
      %v606 = vunpack.c.l.b16 %v254
      %v607 = vunpack.c.l.b16 %v255
      %v608 = vunpack.c.l.b16 %v256
      %v609 = vunpack.c.l.b16 %v257
      %v610 = vunpack.c.l.b16 %v258
      %v611 = vunpack.c.l.b16 %v259
      %v612 = vunpack.c.l.b16 %v260
      %v613 = vunpack.c.l.b16 %v261
      %v614 = vunpack.c.l.b16 %v262
      %v615 = vunpack.c.l.b16 %v263
      %v616 = vunpack.c.l.b16 %v264
      %v617 = vunpack.c.l.b16 %v265
      %v618 = vunpack.c.l.b16 %v266
      %v619 = vunpack.c.l.b16 %v267
      %v620 = vunpack.c.l.b16 %v268
      %v621 = vunpack.c.l.b16 %v269
      %v622 = vunpack.c.l.b16 %v270
      %v623 = vunpack.c.l.b16 %v271
      %v624 = vunpack.c.l.b16 %v272
      %v625 = vunpack.c.l.b16 %v273
      %v626 = vunpack.c.l.b16 %v274
      %v627 = vunpack.c.l.b16 %v275
      %v628 = vunpack.c.l.b16 %v276
      %v629 = vunpack.c.l.b16 %v277
      %v630 = vunpack.c.l.b16 %v278
      %v631 = vunpack.c.l.b16 %v279
      %v632 = vunpack.c.l.b16 %v280
      %v633 = vunpack.c.l.b16 %v281
      %v634 = vunpack.c.l.b16 %v282
      %v635 = vunpack.c.l.b16 %v283
      %v636 = vunpack.c.l.b16 %v284
      %v637 = vunpack.c.l.b16 %v285
      %v638 = vunpack.c.l.b16 %v286
      %v639 = vunpack.c.l.b16 %v287
      %v640 = vunpack.c.l.b16 %v288
      %v641 = vunpack.c.l.b16 %v289
      %v642 = vunpack.c.l.b16 %v290
      %v643 = vunpack.c.l.b16 %v291
      %v644 = vunpack.c.l.b16 %v292
      %v645 = vunpack.c.l.b16 %v293
      %v646 = vunpack.c.l.b16 %v294
      %v647 = vunpack.c.l.b16 %v295
      %v648 = vunpack.c.l.b16 %v296
      %v649 = vunpack.c.l.b16 %v297
      %v650 = vunpack.c.l.b16 %v298
      %v651 = vunpack.c.l.b16 %v299
      %v652 = vunpack.c.l.b16 %v300
      %v653 = vunpack.c.l.b16 %v301
      %v654 = vunpack.c.l.b16 %v302
      %v655 = vunpack.c.l.b16 %v303
      %v656 = vunpack.c.l.b16 %v304
      %v657 = vunpack.c.l.b16 %v305
      %v658 = vunpack.c.l.b16 %v306
      %v659 = vunpack.c.l.b16 %v307
      %v660 = vunpack.c.l.b16 %v308
      %v661 = vunpack.c.l.b16 %v309
      %v662 = vunpack.c.l.b16 %v310
      %v663 = vunpack.c.l.b16 %v311
      %v664 = vunpack.c.l.b16 %v312
      %v665 = vunpack.c.l.b16 %v313
      %v666 = vunpack.c.l.b16 %v314
      %v667 = vunpack.c.l.b16 %v315
      %v668 = vunpack.c.l.b16 %v316
      %v669 = vunpack.c.l.b16 %v317
      %v670 = vunpack.c.l.b16 %v318
      %v671 = vunpack.c.l.b16 %v319
      %v672 = vunpack.c.l.b16 %v320
      %v673 = vunpack.c.l.b16 %v321
      %v674 = vunpack.c.l.b16 %v322
      %v675 = vunpack.c.l.b16 %v323
      %v676 = vunpack.c.l.b16 %v324
      %v677 = vunpack.c.l.b16 %v325
      %v678 = vunpack.c.l.b16 %v326
      %v679 = vpack.c.b16 %v551, %v550
      %v680 = vpack.c.b16 %v553, %v552
      %v681 = vpack.c.b16 %v555, %v554
      %v682 = vpack.c.b16 %v557, %v556
      %v683 = vpack.c.b16 %v559, %v558
      %v684 = vpack.c.b16 %v561, %v560
      %v685 = vpack.c.b16 %v563, %v562
      %v686 = vpack.c.b16 %v565, %v564
      %v687 = vpack.c.b16 %v567, %v566
      %v688 = vpack.c.b16 %v569, %v568
      %v689 = vpack.c.b16 %v571, %v570
      %v690 = vpack.c.b16 %v573, %v572
      %v691 = vpack.c.b16 %v575, %v574
      %v692 = vpack.c.b16 %v577, %v576
      %v693 = vpack.c.b16 %v579, %v578
      %v694 = vpack.c.b16 %v581, %v580
      %v695 = vpack.c.b16 %v583, %v582
      %v696 = vpack.c.b16 %v585, %v584
      %v697 = vpack.c.b16 %v587, %v586
      %v698 = vpack.c.b16 %v589, %v588
      %v699 = vpack.c.b16 %v591, %v590
      %v700 = vpack.c.b16 %v593, %v592
      %v701 = vpack.c.b16 %v595, %v594
      %v702 = vpack.c.b16 %v597, %v596
      %v703 = vpack.c.b16 %v599, %v598
      %v704 = vpack.c.b16 %v601, %v600
      %v705 = vpack.c.b16 %v603, %v602
      %v706 = vpack.c.b16 %v605, %v604
      %v707 = vpack.c.b16 %v607, %v606
      %v708 = vpack.c.b16 %v609, %v608
      %v709 = vpack.c.b16 %v611, %v610
      %v710 = vpack.c.b16 %v613, %v612
      %v711 = vpack.c.b16 %v615, %v614
      %v712 = vpack.c.b16 %v617, %v616
      %v713 = vpack.c.b16 %v619, %v618
      %v714 = vpack.c.b16 %v621, %v620
      %v715 = vpack.c.b16 %v623, %v622
      %v716 = vpack.c.b16 %v625, %v624
      %v717 = vpack.c.b16 %v627, %v626
      %v718 = vpack.c.b16 %v629, %v628
      %v719 = vpack.c.b16 %v631, %v630
      %v720 = vpack.c.b16 %v633, %v632
      %v721 = vpack.c.b16 %v635, %v634
      %v722 = vpack.c.b16 %v637, %v636
      %v723 = vpack.c.b16 %v639, %v638
      %v724 = vpack.c.b16 %v641, %v640
      %v725 = vpack.c.b16 %v643, %v642
      %v726 = vpack.c.b16 %v645, %v644
      %v727 = vpack.c.b16 %v647, %v646
      %v728 = vpack.c.b16 %v649, %v648
      %v729 = vpack.c.b16 %v651, %v650
      %v730 = vpack.c.b16 %v653, %v652
      %v731 = vpack.c.b16 %v655, %v654
      %v732 = vpack.c.b16 %v657, %v656
      %v733 = vpack.c.b16 %v659, %v658
      %v734 = vpack.c.b16 %v661, %v660
      %v735 = vpack.c.b16 %v663, %v662
      %v736 = vpack.c.b16 %v665, %v664
      %v737 = vpack.c.b16 %v667, %v666
      %v738 = vpack.c.b16 %v669, %v668
      %v739 = vpack.c.b16 %v671, %v670
      %v740 = vpack.c.b16 %v673, %v672
      %v741 = vpack.c.b16 %v675, %v674
      %v742 = vpack.c.b16 %v677, %v676
      %v743 = vpack.c.b16 %v678, %v678
      %vm808 = vcmask 39936
      %v810 = vsel %vm808, %v395, 0
      %v813 = vsel %vm808, %v404, 0
      %vm815 = vcmask 1041408
      %vm816 = vcmask 1042432
      %v817 = vsel %vm815, 4294967295, 65535
      %v818 = vsel %vm816, %v817, 0
      %v820 = vand.u32 %v743, %v818
      %822 = vmatpush.bf16.msra.mxu0 %v686
      %823 = vmatpush.bf16.msra.mxu0 %v685
      %824 = vmatpush.bf16.msra.mxu0 %v684
      %825 = vmatpush.bf16.msra.mxu0 %v683
      %826 = vmatpush.bf16.msra.mxu0 %v682
      %827 = vmatpush.bf16.msra.mxu0 %v681
      %828 = vmatpush.bf16.msra.mxu0 %v680
      %829 = vmatpush.bf16.msra.mxu0 %v679
      %830 = vmatmul.bf16.gmra.mxu0 %v387
      %v831 = vpop.f32.mrf.mxu0
      %v832 = vadd.f32 %v329, %v831
      %v833 = vpop.f32.mrf.mxu0
      %v834 = vadd.f32 %v329, %v833
      %835 = vmatmul.bf16.gmra.mxu0 %v396
      %v836 = vpop.f32.mrf.mxu0
      %v837 = vadd.f32 %v329, %v836
      %v838 = vpop.f32.mrf.mxu0
      %v839 = vadd.f32 %v329, %v838
      %840 = vdwg.mxu0
      %841 = vmatpush.bf16.msra.mxu0 %v694
      %842 = vmatpush.bf16.msra.mxu0 %v693
      %843 = vmatpush.bf16.msra.mxu0 %v692
      %844 = vmatpush.bf16.msra.mxu0 %v691
      %845 = vmatpush.bf16.msra.mxu0 %v690
      %846 = vmatpush.bf16.msra.mxu0 %v689
      %847 = vmatpush.bf16.msra.mxu0 %v688
      %848 = vmatpush.bf16.msra.mxu0 %v687
      %849 = vmatmul.bf16.gmra.mxu0 %v388
      %v850 = vpop.f32.mrf.mxu0
      %v851 = vadd.f32 %v832, %v850
      %v852 = vpop.f32.mrf.mxu0
      %v853 = vadd.f32 %v834, %v852
      %854 = vmatmul.bf16.gmra.mxu0 %v397
      %v855 = vpop.f32.mrf.mxu0
      %v856 = vadd.f32 %v837, %v855
      %v857 = vpop.f32.mrf.mxu0
      %v858 = vadd.f32 %v839, %v857
      %859 = vdwg.mxu0
      %860 = vmatpush.bf16.msra.mxu0 %v702
      %861 = vmatpush.bf16.msra.mxu0 %v701
      %862 = vmatpush.bf16.msra.mxu0 %v700
      %863 = vmatpush.bf16.msra.mxu0 %v699
      %864 = vmatpush.bf16.msra.mxu0 %v698
      %865 = vmatpush.bf16.msra.mxu0 %v697
      %866 = vmatpush.bf16.msra.mxu0 %v696
      %867 = vmatpush.bf16.msra.mxu0 %v695
      %868 = vmatmul.bf16.gmra.mxu0 %v389
      %v869 = vpop.f32.mrf.mxu0
      %v870 = vadd.f32 %v851, %v869
      %v871 = vpop.f32.mrf.mxu0
      %v872 = vadd.f32 %v853, %v871
      %873 = vmatmul.bf16.gmra.mxu0 %v398
      %v874 = vpop.f32.mrf.mxu0
      %v875 = vadd.f32 %v856, %v874
      %v876 = vpop.f32.mrf.mxu0
      %v877 = vadd.f32 %v858, %v876
      %878 = vdwg.mxu0
      %879 = vmatpush.bf16.msra.mxu0 %v710
      %880 = vmatpush.bf16.msra.mxu0 %v709
      %881 = vmatpush.bf16.msra.mxu0 %v708
      %882 = vmatpush.bf16.msra.mxu0 %v707
      %883 = vmatpush.bf16.msra.mxu0 %v706
      %884 = vmatpush.bf16.msra.mxu0 %v705
      %885 = vmatpush.bf16.msra.mxu0 %v704
      %886 = vmatpush.bf16.msra.mxu0 %v703
      %887 = vmatmul.bf16.gmra.mxu0 %v390
      %v888 = vpop.f32.mrf.mxu0
      %v889 = vadd.f32 %v870, %v888
      %v890 = vpop.f32.mrf.mxu0
      %v891 = vadd.f32 %v872, %v890
      %892 = vmatmul.bf16.gmra.mxu0 %v399
      %v893 = vpop.f32.mrf.mxu0
      %v894 = vadd.f32 %v875, %v893
      %v895 = vpop.f32.mrf.mxu0
      %v896 = vadd.f32 %v877, %v895
      %897 = vdwg.mxu0
      %898 = vmatpush.bf16.msra.mxu0 %v718
      %899 = vmatpush.bf16.msra.mxu0 %v717
      %900 = vmatpush.bf16.msra.mxu0 %v716
      %901 = vmatpush.bf16.msra.mxu0 %v715
      %902 = vmatpush.bf16.msra.mxu0 %v714
      %903 = vmatpush.bf16.msra.mxu0 %v713
      %904 = vmatpush.bf16.msra.mxu0 %v712
      %905 = vmatpush.bf16.msra.mxu0 %v711
      %906 = vmatmul.bf16.gmra.mxu0 %v391
      %v907 = vpop.f32.mrf.mxu0
      %v908 = vadd.f32 %v889, %v907
      %v909 = vpop.f32.mrf.mxu0
      %v910 = vadd.f32 %v891, %v909
      %911 = vmatmul.bf16.gmra.mxu0 %v400
      %v912 = vpop.f32.mrf.mxu0
      %v913 = vadd.f32 %v894, %v912
      %v914 = vpop.f32.mrf.mxu0
      %v915 = vadd.f32 %v896, %v914
      %916 = vdwg.mxu0
      %917 = vmatpush.bf16.msra.mxu0 %v726
      %918 = vmatpush.bf16.msra.mxu0 %v725
      %919 = vmatpush.bf16.msra.mxu0 %v724
      %920 = vmatpush.bf16.msra.mxu0 %v723
      %921 = vmatpush.bf16.msra.mxu0 %v722
      %922 = vmatpush.bf16.msra.mxu0 %v721
      %923 = vmatpush.bf16.msra.mxu0 %v720
      %924 = vmatpush.bf16.msra.mxu0 %v719
      %925 = vmatmul.bf16.gmra.mxu0 %v392
      %v926 = vpop.f32.mrf.mxu0
      %v927 = vadd.f32 %v908, %v926
      %v928 = vpop.f32.mrf.mxu0
      %v929 = vadd.f32 %v910, %v928
      %930 = vmatmul.bf16.gmra.mxu0 %v401
      %v931 = vpop.f32.mrf.mxu0
      %v932 = vadd.f32 %v913, %v931
      %v933 = vpop.f32.mrf.mxu0
      %v934 = vadd.f32 %v915, %v933
      %935 = vdwg.mxu0
      %936 = vmatpush.bf16.msra.mxu0 %v734
      %937 = vmatpush.bf16.msra.mxu0 %v733
      %938 = vmatpush.bf16.msra.mxu0 %v732
      %939 = vmatpush.bf16.msra.mxu0 %v731
      %940 = vmatpush.bf16.msra.mxu0 %v730
      %941 = vmatpush.bf16.msra.mxu0 %v729
      %942 = vmatpush.bf16.msra.mxu0 %v728
      %943 = vmatpush.bf16.msra.mxu0 %v727
      %944 = vmatmul.bf16.gmra.mxu0 %v393
      %v945 = vpop.f32.mrf.mxu0
      %v946 = vadd.f32 %v927, %v945
      %v947 = vpop.f32.mrf.mxu0
      %v948 = vadd.f32 %v929, %v947
      %949 = vmatmul.bf16.gmra.mxu0 %v402
      %v950 = vpop.f32.mrf.mxu0
      %v951 = vadd.f32 %v932, %v950
      %v952 = vpop.f32.mrf.mxu0
      %v953 = vadd.f32 %v934, %v952
      %954 = vdwg.mxu0
      %955 = vmatpush.bf16.msra.mxu0 %v742
      %956 = vmatpush.bf16.msra.mxu0 %v741
      %957 = vmatpush.bf16.msra.mxu0 %v740
      %958 = vmatpush.bf16.msra.mxu0 %v739
      %959 = vmatpush.bf16.msra.mxu0 %v738
      %960 = vmatpush.bf16.msra.mxu0 %v737
      %961 = vmatpush.bf16.msra.mxu0 %v736
      %962 = vmatpush.bf16.msra.mxu0 %v735
      %963 = vmatmul.bf16.gmra.mxu0 %v394
      %v964 = vpop.f32.mrf.mxu0
      %v965 = vadd.f32 %v946, %v964
      %v966 = vpop.f32.mrf.mxu0
      %v967 = vadd.f32 %v948, %v966
      %968 = vmatmul.bf16.gmra.mxu0 %v403
      %v969 = vpop.f32.mrf.mxu0
      %v970 = vadd.f32 %v951, %v969
      %v971 = vpop.f32.mrf.mxu0
      %v972 = vadd.f32 %v953, %v971
      %973 = vdwg.mxu0
      %974 = vmatpush.bf16.msra.mxu0 0
      %975 = vmatpush.bf16.msra.mxu0 0
      %976 = vmatpush.bf16.msra.mxu0 0
      %977 = vmatpush.bf16.msra.mxu0 0
      %978 = vmatpush.bf16.msra.mxu0 0
      %979 = vmatpush.bf16.msra.mxu0 0
      %980 = vmatpush.bf16.msra.mxu0 0
      %981 = vmatpush.bf16.msra.mxu0 %v820
      %982 = vmatmul.bf16.gmra.mxu0 %v810
      %v983 = vpop.f32.mrf.mxu0
      %v984 = vadd.f32 %v965, %v983
      %v985 = vpop.f32.mrf.mxu0
      %v986 = vadd.f32 %v967, %v985
      %987 = vmatmul.bf16.gmra.mxu0 %v813
      %v988 = vpop.f32.mrf.mxu0
      %v989 = vadd.f32 %v970, %v988
      %v990 = vpop.f32.mrf.mxu0
      %v991 = vadd.f32 %v972, %v990
      %992 = vdwg.mxu0
      %v993 = vmul.f32 %v984, 0.5
      %v994 = vmul.f32 %v986, 0.5
      %v995 = vmul.f32 %v989, 0.5
      %v996 = vmul.f32 %v991, 0.5
      %v997 = vmul.f32 %v984, 0.70710677
      %v998 = vmul.f32 %v986, 0.70710677
      %v999 = vmul.f32 %v989, 0.70710677
      %v1000 = vmul.f32 %v991, 0.70710677
      %v1001 = vand.u32 2147483647, %v997
      %v1002 = vand.u32 2147483647, %v998
      %v1003 = vand.u32 2147483647, %v999
      %v1004 = vand.u32 2147483647, %v1000
      %v1005 = vmul.f32 %v1001, 0.3275911
      %v1006 = vmul.f32 %v1002, 0.3275911
      %v1007 = vmul.f32 %v1003, 0.3275911
      %v1008 = vmul.f32 %v1004, 0.3275911
      %v1009 = vadd.f32 %v1005, 1.0
      %v1010 = vadd.f32 %v1006, 1.0
      %v1011 = vadd.f32 %v1007, 1.0
      %v1012 = vadd.f32 %v1008, 1.0
      %v1013 = vrcp.pop %v1009
      %v1014 = vrcp.pop %v1010
      %v1015 = vrcp.pop %v1011
      %v1016 = vrcp.pop %v1012
      %v1017 = vmul.f32 %v1013, 1.0614054
      %v1018 = vmul.f32 %v1014, 1.0614054
      %v1019 = vmul.f32 %v1015, 1.0614054
      %v1020 = vmul.f32 %v1016, 1.0614054
      %v1021 = vadd.f32 %v1017, -1.4531521
      %v1022 = vadd.f32 %v1018, -1.4531521
      %v1023 = vadd.f32 %v1019, -1.4531521
      %v1024 = vadd.f32 %v1020, -1.4531521
      %v1025 = vmul.f32 %v1021, %v1013
      %v1026 = vmul.f32 %v1022, %v1014
      %v1027 = vmul.f32 %v1023, %v1015
      %v1028 = vmul.f32 %v1024, %v1016
      %v1029 = vadd.f32 %v1025, 1.4214138
      %v1030 = vadd.f32 %v1026, 1.4214138
      %v1031 = vadd.f32 %v1027, 1.4214138
      %v1032 = vadd.f32 %v1028, 1.4214138
      %v1033 = vmul.f32 %v1029, %v1013
      %v1034 = vmul.f32 %v1030, %v1014
      %v1035 = vmul.f32 %v1031, %v1015
      %v1036 = vmul.f32 %v1032, %v1016
      %v1037 = vadd.f32 %v1033, -0.28449672
      %v1038 = vadd.f32 %v1034, -0.28449672
      %v1039 = vadd.f32 %v1035, -0.28449672
      %v1040 = vadd.f32 %v1036, -0.28449672
      %v1041 = vmul.f32 %v1037, %v1013
      %v1042 = vmul.f32 %v1038, %v1014
      %v1043 = vmul.f32 %v1039, %v1015
      %v1044 = vmul.f32 %v1040, %v1016
      %v1045 = vadd.f32 %v1041, 0.2548296
      %v1046 = vadd.f32 %v1042, 0.2548296
      %v1047 = vadd.f32 %v1043, 0.2548296
      %v1048 = vadd.f32 %v1044, 0.2548296
      %v1049 = vmul.f32 %v1045, %v1013
      %v1050 = vmul.f32 %v1046, %v1014
      %v1051 = vmul.f32 %v1047, %v1015
      %v1052 = vmul.f32 %v1048, %v1016
      %v1053 = vsub.f32 0.0, %v1001
      %v1054 = vsub.f32 0.0, %v1002
      %v1055 = vsub.f32 0.0, %v1003
      %v1056 = vsub.f32 0.0, %v1004
      %v1057 = vmul.f32 %v1053, %v1001
      %v1058 = vmul.f32 %v1054, %v1002
      %v1059 = vmul.f32 %v1055, %v1003
      %v1060 = vmul.f32 %v1056, %v1004
      %v1061 = vmul.f32 %v1057, 1.442695
      %v1062 = vpow.pop %v1061
      %v1063 = vmul.f32 %v1058, 1.442695
      %v1064 = vpow.pop %v1063
      %v1065 = vmul.f32 %v1059, 1.442695
      %v1066 = vpow.pop %v1065
      %v1067 = vmul.f32 %v1060, 1.442695
      %v1068 = vpow.pop %v1067
      %v1069 = vmul.f32 %v1049, %v1062
      %v1070 = vmul.f32 %v1050, %v1064
      %v1071 = vmul.f32 %v1051, %v1066
      %v1072 = vmul.f32 %v1052, %v1068
      %v1073 = vsub.f32 1.0, %v1069
      %v1074 = vsub.f32 1.0, %v1070
      %v1075 = vsub.f32 1.0, %v1071
      %v1076 = vsub.f32 1.0, %v1072
      %vm1077 = vcmp.ge.f32.partialorder %v997, 0.0
      %vm1078 = vcmp.ge.f32.partialorder %v998, 0.0
      %vm1079 = vcmp.ge.f32.partialorder %v999, 0.0
      %vm1080 = vcmp.ge.f32.partialorder %v1000, 0.0
      %v1081 = vsub.f32 0.0, %v1073
      %v1082 = vsub.f32 0.0, %v1074
      %v1083 = vsub.f32 0.0, %v1075
      %v1084 = vsub.f32 0.0, %v1076
      %v1085 = vsel %vm1077, %v1073, %v1081
      %v1086 = vsel %vm1078, %v1074, %v1082
      %v1087 = vsel %vm1079, %v1075, %v1083
      %v1088 = vsel %vm1080, %v1076, %v1084
      %v1089 = vadd.f32 %v1085, 1.0
      %v1090 = vadd.f32 %v1086, 1.0
      %v1091 = vadd.f32 %v1087, 1.0
      %v1092 = vadd.f32 %v1088, 1.0
      %v1093 = vmul.f32 %v993, %v1089
      %v1094 = vmul.f32 %v994, %v1090
      %v1095 = vmul.f32 %v995, %v1091
      %v1096 = vmul.f32 %v996, %v1092
      %1097 = vst [vmem:[%s175] sm:$0xff] %v1093
      %1098 = vst [vmem:[%s175 + $0x8] sm:$0xff] %v1094
      %1099 = vst [vmem:[%s175 + $0x10] sm:$0xff] %v1095
      %1100 = vst [vmem:[%s175 + $0x18] sm:$0xff] %v1096
      %s1101 = smul.u32 4, %s14
      %p1102 = scmp.lt.s32.totalorder %s1101, 15
      %s1103 = scalar_select %p1102, %s1101, 15
      %s1104 = smul.addr %s1103, 8
      %s1105 = scalar_lea.vmem %s3, %s1104
      // Predicated region
      $region33: #{_overlap_patch_embed_impl.1} parent=31 // pred_check
        %p1106 = pneg %p100
      $region34: #{_overlap_patch_embed_impl.1} parent=31 // pred_check_branch
        %1108 = sbr.rel (%p1106) target = $region36
      $region35: #{_overlap_patch_embed_impl.1} parent=31 // pred_region
        %s1109 = smul.u32 4, %s14
      $region36: #{_overlap_patch_embed_impl.1} parent=31 // pred_fallthru
        _
    $region32: #{_overlap_patch_embed_impl.1} parent=5 // pred_fallthru
      _
    %p1110 = scmp.le.s32.totalorder 2, %s9
    // Predicated region
    $region37: #{_overlap_patch_embed_impl.1} parent=5 // pred_check
      %p1111 = pneg %p1110
    $region38: #{_overlap_patch_embed_impl.1} parent=5 // pred_check_branch
      %1113 = sbr.rel (%p1111) target = $region40
    $region39: #{_overlap_patch_embed_impl.1} parent=5 // pred_region
      %s1114 = ssub.s32 %s9, 2
      // Predicated region
      $region41: #{_overlap_patch_embed_impl.1} parent=39 // pred_check
        %p1115 = pneg %p106
      $region42: #{_overlap_patch_embed_impl.1} parent=39 // pred_check_branch
        %1117 = sbr.rel (%p1115) target = $region44
      $region43: #{_overlap_patch_embed_impl.1} parent=39 // pred_region
        %s1118 = smul.u32 4, %s15
        %p1119 = scmp.lt.s32.totalorder %s1118, 15
        %s1120 = scalar_select %p1119, %s1118, 15
        %s1121 = smul.addr %s1120, 8
        %s1122 = scalar_lea.vmem %s3, %s1121
      $region44: #{_overlap_patch_embed_impl.1} parent=39 // pred_fallthru
        _
    $region40: #{_overlap_patch_embed_impl.1} parent=5 // pred_fallthru
      _
  $region6: #{_overlap_patch_embed_impl.1} parent=0 // loop_footer
    %s13 = sadd.s32 1, %s9
  $region7: #{_overlap_patch_embed_impl.1} parent=0 // loop_footer_branch
    %8 = sbr.rel target = $region3
  $region8: #{_overlap_patch_embed_impl.1} parent=0 // loop_exit
    _

</llo_original>
